<compile_context>
chip_gen: v5e
topology: v5e:2x2
jax: 0.10.0
libtpu: 0.0.40
codegen_flags: <defaults>
</compile_context>

<pallas_src>
import functools

import jax
import jax.numpy as jnp
from jax import lax
from jax.experimental import pallas as pl
from jax.experimental.pallas import tpu as pltpu

_LANES = 128
_NEG = -1e30  # finite mask value for padded classes (avoids 0 * inf NaNs)


# ---------------------------------------------------------------------------
# helpers
# ---------------------------------------------------------------------------
def _round_up(x, m):
    return (x + m - 1) // m * m


def _vmem_capacity_bytes():
    """Best-effort per-core VMEM capacity; conservative 64 MiB fallback."""
    try:
        info = pltpu.get_tpu_info()
        cap = getattr(info, "vmem_capacity_bytes", None)
        if cap:
            return int(cap)
    except Exception:
        pass
    return 64 * 1024 * 1024


def _num_tensorcores():
    """Best-effort TensorCore count per chip (v7x has 2, v5e/v6e have 1)."""
    try:
        d = jax.devices()[0]
        nc = getattr(d, "num_cores", None)
        if nc:
            return int(nc)
        kind = str(getattr(d, "device_kind", "")).lower()
        if "v7" in kind or "7x" in kind:
            return 2
    except Exception:
        pass
    return 1


def _pick_tiles(B, dpad, npad, head_bytes, budget, num_cores, x_bytes=4):
    """Choose (tb, tk) under a VMEM byte budget.

    W (dpad x npad, bf16) is streamed once per B-tile, so arithmetic
    intensity w.r.t. the W stream is exactly `tb` FLOPs/byte: the bigger tb
    the better, until VMEM runs out.  On multi-core chips keep the number of
    B tiles a multiple of the core count so the parallel axis uses the whole
    chip.  tk is picked as large as possible while keeping >= 2 K-steps so
    the W DMA overlaps the MXU.
    """

    def usage(tb, tk):
        x = 2 * tb * tk * x_bytes            # x blocks (double-buffered)
        w = 2 * tk * npad * 2                # bf16 W blocks (double-buffered)
        heads = 2 * tb * npad * head_bytes   # cls + kd blocks
        bias = 2 * npad * 4
        lbl = 2 * tb * 4
        out = 2 * 8 * _LANES * 4
        acc = tb * npad * 4                  # f32 teacher accumulator scratch
        return x + w + heads + bias + lbl + out + acc

    # Legal tb: divisors of B that are multiples of 8, plus the full batch.
    tb_cands = {B}
    for t in (512, 384, 256, 192, 128, 64, 32, 16, 8):
        if t < B and B % t == 0:
            tb_cands.add(t)

    # Legal tk: multiples of 128 dividing dpad, plus full dpad.
    tk_cands = {dpad}
    for t in (2048, 1024, 512, 384, 256, 128):
        if t < dpad and dpad % t == 0:
            tk_cands.add(t)

    def pick_tk(tb):
        best = None
        for tk in sorted(tk_cands, reverse=True):
            if usage(tb, tk) > budget:
                continue
            key = (dpad // tk >= 2, tk)      # prefer >=2 K-steps, then bigger
            if best is None or key > best[0]:
                best = (key, tk)
        return None if best is None else best[1]

    def tb_score(tb):
        n_bt = B // tb
        core_ok = (num_cores == 1) or (n_bt >= num_cores
                                       and n_bt % num_cores == 0)
        return (core_ok, tb % 256 == 0, tb)

    for tb in sorted(tb_cands, key=tb_score, reverse=True):
        tk = pick_tk(tb)
        if tk is not None:
            return tb, tk
    return min(tb_cands), min(tk_cands)      # nothing fit; smallest legal tiles


def _log_softmax(x):
    m = jnp.max(x, axis=-1, keepdims=True)
    z = x - m
    return z - jnp.log(jnp.sum(jnp.exp(z), axis=-1, keepdims=True))


# ---------------------------------------------------------------------------
# kernels
# ---------------------------------------------------------------------------
def _base_ce_kernel(cls_ref, lbl_ref, loss_ref, *, n_classes):
    """distillation_type == 'none': mean CE only (per-B-tile partial sum)."""
    tb, npad = cls_ref.shape
    col = lax.broadcasted_iota(jnp.int32, (tb, npad), 1)

    logits = cls_ref[...].astype(jnp.float32)
    if npad != n_classes:                               # static skip when aligned
        logits = jnp.where(col < n_classes, logits, _NEG)
    logp = _log_softmax(logits)

    onehot = col == lbl_ref[...]                        # vectorized one-hot
    partial = -jnp.sum(jnp.where(onehot, logp, 0.0))
    loss_ref[...] = jnp.broadcast_to(partial, loss_ref.shape)


def _fused_distill_kernel(x_ref, w_ref, b_ref, cls_ref, kd_ref, lbl_ref,
                          loss_ref, teacher_acc,
                          *, n_classes, alpha, tau, distillation_type):
    ki = pl.program_id(1)
    n_k = pl.num_programs(1)

    # --- teacher logits: K-tiled MXU matmul (in-kernel bf16 feed, f32 acc) ---
    part = jnp.dot(x_ref[...].astype(jnp.bfloat16), w_ref[...],
                   preferred_element_type=jnp.float32)

    @pl.when(ki == 0)
    def _():
        teacher_acc[...] = part              # no bias broadcast / RMW on step 0

    @pl.when(ki > 0)
    def _():
        teacher_acc[...] += part

    # --- finalize: base CE + distillation term, once per B-tile ---
    @pl.when(ki == n_k - 1)
    def _():
        tb, npad = teacher_acc.shape
        col = lax.broadcasted_iota(jnp.int32, (tb, npad), 1)
        pad_cols = npad != n_classes                    # static

        cls = cls_ref[...].astype(jnp.float32)
        kd = kd_ref[...].astype(jnp.float32)
        teacher = teacher_acc[...] + b_ref[...]         # bias added once, here
        if pad_cols:
            valid = col < n_classes
            cls = jnp.where(valid, cls, _NEG)
            kd = jnp.where(valid, kd, _NEG)
            teacher = jnp.where(valid, teacher, _NEG)

        onehot = col == lbl_ref[...]                    # vectorized one-hot
        logp = _log_softmax(cls)
        base_partial = -jnp.sum(jnp.where(onehot, logp, 0.0))

        if distillation_type == "soft":
            t_inv = 1.0 / tau
            s = _log_softmax(kd * t_inv)
            t = _log_softmax(teacher * t_inv)
            # F.kl_div(s, t, reduction='sum', log_target=True) * T^2 / numel
            kl = jnp.exp(t) * (t - s)
            if pad_cols:
                kl = jnp.where(valid, kl, 0.0)
            dist_partial = jnp.sum(kl) * (tau * tau) / n_classes
        else:  # "hard": CE(outputs_kd, argmax(teacher)), first-max tiebreak
            tmax = jnp.max(teacher, axis=-1, keepdims=True)
            idx = jnp.min(jnp.where(teacher == tmax, col, npad),
                          axis=-1, keepdims=True)
            logp_kd = _log_softmax(kd)
            dist_partial = -jnp.sum(jnp.where(col == idx, logp_kd, 0.0))

        partial = (1.0 - alpha) * base_partial + alpha * dist_partial
        loss_ref[...] = jnp.broadcast_to(partial, loss_ref.shape)


# ---------------------------------------------------------------------------
# one-time teacher preparation (hoisted out of the per-step loss call)
# ---------------------------------------------------------------------------
def prepare_teacher(teacher_w, teacher_b):
    """Cast the fixed linear teacher to bf16 and pad it once.

    W is the largest tensor (hundreds of MB for a real teacher); re-casting /
    re-padding it every loss call would add ~one extra W stream of HBM traffic
    per step, so it is done exactly once here.
    """
    D, N = teacher_w.shape
    npad = _round_up(N, _LANES)
    dpad = _round_up(D, _LANES)
    w = teacher_w.astype(jnp.bfloat16)
    b = teacher_b.reshape(1, N).astype(jnp.float32)
    if dpad != D or npad != N:
        w = jnp.pad(w, ((0, dpad - D), (0, npad - N)))
    if npad != N:
        b = jnp.pad(b, ((0, 0), (0, npad - N)))
    return {"w": w, "b": b, "d": D, "n": N}


# ---------------------------------------------------------------------------
# wrapper
# ---------------------------------------------------------------------------
def distillation_loss(inputs, outputs, labels, teacher=None,
                      distillation_type="soft", alpha=0.5, tau=3.0):
    assert distillation_type in ("none", "soft", "hard")

    outputs_kd = None
    if isinstance(outputs, (tuple, list)):
        outputs, outputs_kd = outputs
    B, N = outputs.shape

    npad = _round_up(N, _LANES)
    pad_n = npad - N

    capacity = _vmem_capacity_bytes()
    budget = int(0.70 * capacity)                       # tile-picker budget
    vmem_limit = int(min(0.85 * capacity, capacity - (8 << 20)))
    num_cores = _num_tensorcores()

    labels2d = labels.astype(jnp.int32).reshape(B, 1)
    cls_p = jnp.pad(outputs, ((0, 0), (0, pad_n))) if pad_n else outputs
    cls_bytes = cls_p.dtype.itemsize

    # ---------------- distillation_type == "none": CE only ----------------
    if distillation_type == "none":
        tb, _ = _pick_tiles(B, _LANES, npad, cls_bytes, budget, num_cores,
                            x_bytes=0)
        n_bt = B // tb
        kernel = functools.partial(_base_ce_kernel, n_classes=N)
        partials = pl.pallas_call(
            kernel,
            out_shape=jax.ShapeDtypeStruct((n_bt, 8, _LANES), jnp.float32),
            grid_spec=pltpu.PrefetchScalarGridSpec(
                num_scalar_prefetch=0,
                grid=(n_bt,),
                in_specs=[pl.BlockSpec((tb, npad), lambda bi: (bi, 0)),
                          pl.BlockSpec((tb, 1), lambda bi: (bi, 0))],
                out_specs=pl.BlockSpec((1, 8, _LANES), lambda bi: (bi, 0, 0)),
            ),
            compiler_params=pltpu.CompilerParams(
                dimension_semantics=("parallel",),
                vmem_limit_bytes=vmem_limit),
            cost_estimate=pl.CostEstimate(
                flops=10 * B * npad,
                transcendentals=2 * B * npad,
                bytes_accessed=cls_p.size * cls_bytes + B * 4
                + n_bt * 8 * _LANES * 4),
        )(cls_p, labels2d)
        return jnp.sum(partials[:, 0, 0]) / B

    # ---------------- fused teacher matmul + distillation loss -------------
    if outputs_kd is None:
        raise ValueError(
            "When knowledge distillation is enabled, the model is expected to "
            "return a Tuple[Tensor, Tensor] with the output of the "
            "class_token and the dist_token")
    if teacher is None:
        raise ValueError("prepare_teacher(...) result required for distillation")
    assert teacher["n"] == N

    kd_p = jnp.pad(outputs_kd, ((0, 0), (0, pad_n))) if pad_n else outputs_kd
    kd_bytes = kd_p.dtype.itemsize

    w_p, b_p, D = teacher["w"], teacher["b"], teacher["d"]
    dpad = w_p.shape[0]

    # x stays in its original dtype in HBM (no wrapper-side cast pass); the
    # kernel casts each (tb, tk) tile to bf16 right before the MXU dot.
    x_flat = inputs.reshape(B, -1)
    assert x_flat.shape[1] == D
    if dpad != D:
        x_flat = jnp.pad(x_flat, ((0, 0), (0, dpad - D)))
    x_bytes = x_flat.dtype.itemsize

    tb, tk = _pick_tiles(B, dpad, npad, cls_bytes + kd_bytes, budget,
                         num_cores, x_bytes=x_bytes)
    n_bt, n_kt = B // tb, dpad // tk

    kernel = functools.partial(
        _fused_distill_kernel, n_classes=N, alpha=float(alpha),
        tau=float(tau), distillation_type=distillation_type)

    bytes_accessed = (x_flat.size * x_bytes
                      + w_p.size * 2 * n_bt            # W streamed per B-tile
                      + b_p.size * 4
                      + cls_p.size * cls_bytes + kd_p.size * kd_bytes
                      + B * 4 + n_bt * 8 * _LANES * 4)

    partials = pl.pallas_call(
        kernel,
        out_shape=jax.ShapeDtypeStruct((n_bt, 8, _LANES), jnp.float32),
        grid_spec=pltpu.PrefetchScalarGridSpec(
            num_scalar_prefetch=0,
            grid=(n_bt, n_kt),
            in_specs=[
                pl.BlockSpec((tb, tk), lambda bi, ki: (bi, ki)),     # x
                pl.BlockSpec((tk, npad), lambda bi, ki: (ki, 0)),    # W
                pl.BlockSpec((1, npad), lambda bi, ki: (0, 0)),      # bias
                pl.BlockSpec((tb, npad), lambda bi, ki: (bi, 0)),    # cls head
                pl.BlockSpec((tb, npad), lambda bi, ki: (bi, 0)),    # kd head
                pl.BlockSpec((tb, 1), lambda bi, ki: (bi, 0)),       # labels
            ],
            out_specs=pl.BlockSpec((1, 8, _LANES), lambda bi, ki: (bi, 0, 0)),
            scratch_shapes=[pltpu.VMEM((tb, npad), jnp.float32)],
        ),
        compiler_params=pltpu.CompilerParams(
            dimension_semantics=("parallel", "arbitrary"),
            vmem_limit_bytes=vmem_limit),
        cost_estimate=pl.CostEstimate(
            flops=2 * B * dpad * npad + 30 * B * npad,
            transcendentals=5 * B * npad,
            bytes_accessed=bytes_accessed),
    )(x_flat, w_p, b_p, cls_p, kd_p, labels2d)

    return jnp.sum(partials[:, 0, 0]) / B


# ---------------------------------------------------------------------------
# Pure-JAX reference for verification
# ---------------------------------------------------------------------------
def _reference(inputs, outputs_tuple, labels, w, b, distillation_type,
               alpha, tau):
    outputs, outputs_kd = outputs_tuple
    B, N = outputs.shape
    logp = jax.nn.log_softmax(outputs.astype(jnp.float32), axis=1)
    base = -jnp.mean(logp[jnp.arange(B), labels])
    if distillation_type == "none":
        return base
    # teacher matches the kernel's bf16 MXU inputs with f32 accumulation
    x_bf = inputs.reshape(B, -1).astype(jnp.bfloat16).astype(jnp.float32)
    w_bf = w.astype(jnp.bfloat16).astype(jnp.float32)
    teacher = jnp.dot(x_bf, w_bf, precision=lax.Precision.HIGHEST) + b
    if distillation_type == "soft":
        T = tau
        s = jax.nn.log_softmax(outputs_kd / T, axis=1)
        t = jax.nn.log_softmax(teacher / T, axis=1)
        dist = jnp.sum(jnp.exp(t) * (t - s)) * (T * T) / (B * N)
    else:
        hard_lbl = jnp.argmax(teacher, axis=1)
        logp_kd = jax.nn.log_softmax(outputs_kd, axis=1)
        dist = -jnp.mean(logp_kd[jnp.arange(B), hard_lbl])
    return base * (1 - alpha) + dist * alpha


if __name__ == "__main__":
    key = jax.random.PRNGKey(0)
    k_x, k_cls, k_kd, k_lbl, k_w = jax.random.split(key, 5)

    B, C, H, W = 2, 4, 16, 16
    N_CLASSES = 16
    D = C * H * W

    inputs = jax.random.normal(k_x, (B, C, H, W), jnp.float32)           # NCHW
    outputs_cls = jax.random.normal(k_cls, (B, N_CLASSES), jnp.float32)  # class head
    outputs_kd = jax.random.normal(k_kd, (B, N_CLASSES), jnp.float32)    # dist head
    labels = jax.random.randint(k_lbl, (B,), 0, N_CLASSES, jnp.int32)

    # deterministic synthetic teacher weights; padded/cast exactly once
    teacher_w = 0.02 * jax.random.normal(k_w, (D, N_CLASSES), jnp.float32)
    teacher_b = jnp.linspace(-0.1, 0.1, N_CLASSES, dtype=jnp.float32)
    teacher = jax.block_until_ready(prepare_teacher(teacher_w, teacher_b))

    alpha, tau = 0.5, 3.0

    ok = True
    for dtype_ in ("none", "soft", "hard"):
        loss = distillation_loss(
            inputs, (outputs_cls, outputs_kd), labels, teacher,
            distillation_type=dtype_, alpha=alpha, tau=tau,
        )
        loss = jax.block_until_ready(loss)
        ref = _reference(inputs, (outputs_cls, outputs_kd), labels,
                         teacher_w, teacher_b, dtype_, alpha, tau)
        if not jnp.allclose(loss, ref, rtol=2e-4, atol=1e-5):
            ok = False
            print(f"MISMATCH [{dtype_}]: kernel={loss} ref={ref}")

    if ok:
        print("KERNEL_OK")
</pallas_src>

<mosaic_0001>
module attributes {stable_mosaic.version = 11 : i64} {
  func.func @_base_ce_kernel(%arg0: i32, %arg1: memref<2x128xf32, #tpu.memory_space<vmem>>, %arg2: memref<2x1xi32, #tpu.memory_space<vmem>>, %arg3: memref<1x8x128xf32, #tpu.memory_space<vmem>>) attributes {dimension_semantics = [#tpu.dimension_semantics<parallel>], iteration_bounds = array<i64: 1>, scalar_prefetch = 0 : i64, scratch_operands = 0 : i64, tpu.core_type = #tpu.core_type<tc>, window_params = [{transform_indices = @transform_0, window_bounds = array<i64: 2, 128>}, {transform_indices = @transform_1, window_bounds = array<i64: 2, 1>}, {transform_indices = @transform_2, window_bounds = array<i64: 1, 8, 128>}]} {
    %0 = tpu.iota {dimensions = array<i32: 1>} : vector<2x128xi32>
    %c0 = arith.constant 0 : index
    %c0_0 = arith.constant 0 : index
    %1 = vector.load %arg1[%c0, %c0_0] : memref<2x128xf32, #tpu.memory_space<vmem>>, vector<2x128xf32>
    %c16_i32 = arith.constant 16 : i32
    %2 = vector.broadcast %c16_i32 : i32 to vector<2x128xi32>
    %3 = arith.cmpi slt, %0, %2 : vector<2x128xi32>
    %cst = arith.constant -1.000000e+30 : f32
    %4 = vector.broadcast %cst : f32 to vector<2x128xf32>
    %5 = arith.select %3, %1, %4 : vector<2x128xi1>, vector<2x128xf32>
    %cst_1 = arith.constant dense<0xFF800000> : vector<2xf32>
    %6 = vector.multi_reduction <maximumf>, %5, %cst_1 [1] : vector<2x128xf32> to vector<2xf32>
    %7 = vector.shape_cast %6 : vector<2xf32> to vector<2x1xf32>
    %8 = vector.broadcast %7 : vector<2x1xf32> to vector<2x128xf32>
    %9 = arith.subf %5, %8 : vector<2x128xf32>
    %10 = math.exp %9 : vector<2x128xf32>
    %cst_2 = arith.constant dense<0.000000e+00> : vector<2xf32>
    %11 = vector.multi_reduction <add>, %10, %cst_2 [1] : vector<2x128xf32> to vector<2xf32>
    %12 = vector.shape_cast %11 : vector<2xf32> to vector<2x1xf32>
    %13 = math.log %12 : vector<2x1xf32>
    %14 = vector.broadcast %13 : vector<2x1xf32> to vector<2x128xf32>
    %15 = arith.subf %9, %14 : vector<2x128xf32>
    %c0_3 = arith.constant 0 : index
    %c0_4 = arith.constant 0 : index
    %16 = vector.load %arg2[%c0_3, %c0_4] : memref<2x1xi32, #tpu.memory_space<vmem>>, vector<2x1xi32>
    %17 = vector.broadcast %16 : vector<2x1xi32> to vector<2x128xi32>
    %18 = arith.cmpi eq, %0, %17 : vector<2x128xi32>
    %cst_5 = arith.constant 0.000000e+00 : f32
    %19 = vector.broadcast %cst_5 : f32 to vector<2x128xf32>
    %20 = arith.select %18, %15, %19 : vector<2x128xi1>, vector<2x128xf32>
    %21 = vector.shape_cast %20 : vector<2x128xf32> to vector<1x2x128xf32>
    %cst_6 = arith.constant dense<0.000000e+00> : vector<1xf32>
    %22 = vector.multi_reduction <add>, %21, %cst_6 [1, 2] : vector<1x2x128xf32> to vector<1xf32>
    %23 = vector.shape_cast %22 : vector<1xf32> to vector<1x1x1xf32>
    %24 = vector.extract %23[0, 0, 0] : f32 from vector<1x1x1xf32>
    %cst_7 = arith.constant 0.000000e+00 : f32
    %25 = arith.subf %cst_7, %24 : f32
    %26 = vector.broadcast %25 : f32 to vector<1x8x128xf32>
    %c0_8 = arith.constant 0 : index
    %c0_9 = arith.constant 0 : index
    %c0_10 = arith.constant 0 : index
    %27 = vector.load %arg3[%c0_8, %c0_9, %c0_10] : memref<1x8x128xf32, #tpu.memory_space<vmem>>, vector<1x8x128xf32>
    tpu.vector_store %arg3[%c0_8, %c0_9, %c0_10], %26 {strides = array<i32>} : memref<1x8x128xf32, #tpu.memory_space<vmem>>, vector<1x8x128xf32>,
    return
  }
  func.func @transform_0(%arg0: i32) -> (i32, i32) {
    %c0_i32 = arith.constant 0 : i32
    %c0_i32_0 = arith.constant 0 : i32
    return %arg0, %c0_i32 : i32, i32
  }
  func.func @transform_1(%arg0: i32) -> (i32, i32) {
    %c0_i32 = arith.constant 0 : i32
    %c0_i32_0 = arith.constant 0 : i32
    return %arg0, %c0_i32 : i32, i32
  }
  func.func @transform_2(%arg0: i32) -> (i32, i32, i32) {
    %c0_i32 = arith.constant 0 : i32
    %c0_i32_0 = arith.constant 0 : i32
    %c0_i32_1 = arith.constant 0 : i32
    return %arg0, %c0_i32, %c0_i32_0 : i32, i32, i32
  }
}

</mosaic_0001>

<llo_original>
// kernel: tpu_custom_call.1
$region0: #{tpu_custom_call.1}
  #allocation0 [shape = 'u32[]', space=smem, size = 0x4, offset = 0x4, fixed_abs, tag = 'smem constant byte address 0x4 - core index']
  #allocation1 [shape = 'u32[72,128]{1,0:T(1,128)}', space=vmem, size = 0x9000, scoped, tag = 'internal scratch']
  %s0 = inlined_call_operand.vmem [shape: f32[2,128], index: 0, kind: input, shape index: {}]
  %s1 = inlined_call_operand.vmem [shape: s32[2,1], index: 1, kind: input, shape index: {}]
  %s2 = inlined_call_operand.hbm [shape: f32[1,8,128], index: 2, kind: output, shape index: {}]
  %s3 = sld [smem:[#allocation0]]
  $region18: #{tpu_custom_call.1} parent=0
    _
  %s5 = ssub.s32 1, %s3
  %s6 = scalar_select 0, %s5, %s3
  $region1: #{tpu_custom_call.1} parent=0
    #allocation2 [shape = 'u8[4096]{0}', space=vmem, size = 0x1000, scoped, tag = 'output window, operand 0, single buffered']
    #allocation3 [shape = 's32[1]{0}', space=sflag, size = 0x4, scoped, tag = 'scoped memory for tpu_custom_call.1']
    %7 = vsyncpa [#allocation3], 0
    // Predicated region
    $region2: #{tpu_custom_call.1} parent=1 // pred_check
      _
    $region3: #{tpu_custom_call.1} parent=1 // pred_check_branch
      %9 = sbr.rel (0) target = $region5
    $region4: #{tpu_custom_call.1} parent=1 // pred_region
      _
    $region5: #{tpu_custom_call.1} parent=1 // pred_fallthru
      _
    // Predicated region
    $region6: #{tpu_custom_call.1} parent=1 // pred_check
      _
    $region7: #{tpu_custom_call.1} parent=1 // pred_check_branch
      %11 = sbr.rel (0) target = $region9
    $region8: #{tpu_custom_call.1} parent=1 // pred_region
      _
    $region9: #{tpu_custom_call.1} parent=1 // pred_fallthru
      _
    %v12 = vlaneseq
    %v13 = vand.u32 %v12, 127
    %v14 = vld [vmem:[%s0] sm:$0x3]
    %vm15 = vcmp.lt.s32.totalorder %v13, 16
    %v16 = vsel %vm15, %v14, -1e+30
    %vm17 = vcmask 1041408
    %v18 = vsel %vm17, %v16, -inf
    %19 = vmax.xlane.f32.xlu0 %v18
    %v20 = vpop.xlane.xlu0 %19
    %v21 = vsub.f32 %v16, %v20
    %v22 = vmul.f32 %v21, 1.442695
    %v23 = vpow.pop %v22
    %v24 = vsel %vm17, %v23, 0.0
    %25 = vadd.xlane.f32.xlu0 %v24
    %v26 = vpop.xlane.xlu0 %25
    %v27 = vlog2.pop %v26
    %v28 = vmul.f32 %v27, 0.6931472
    %v29 = vsub.f32 %v21, %v28
    %v30 = vld [vmem:[%s1] sm:$0x3]
    %31 = vset.pattern.permute.xlu0 0
    %32 = vperm.xlu0 %31, %v30
    %v33 = vpop.permute.xlu0 %32
    %vm34 = vcmp.eq.s32.totalorder %v13, %v33
    %v35 = vsel %vm34, %v29, 0.0
    %v36 = vsel %vm17, %v35, 0.0
    %37 = vadd.xlane.f32.xlu0 %v36
    %v38 = vpop.xlane.xlu0 %37
    %v39 = vrot.slane %v38, 4
    %v40 = vadd.f32 %v38, %v39
    %v41 = vrot.slane %v40, 2
    %v42 = vadd.f32 %v40, %v41
    %v43 = vrot.slane %v42, 1
    %v44 = vadd.f32 %v42, %v43
    %s45 = vtos %v44
    %s46 = ssub.f32 0.0, %s45
    %v47 = vstv %s46
    %48 = vst [vmem:[#allocation2] sm:$0xff] %v47
    // Predicated region
    $region10: #{tpu_custom_call.1} parent=1 // pred_check
      _
    $region11: #{tpu_custom_call.1} parent=1 // pred_check_branch
      %50 = sbr.rel (0) target = $region13
    $region12: #{tpu_custom_call.1} parent=1 // pred_region
      %52 = vsyncadd [#allocation3], 0
      %s54 = sshll.u32 [#allocation2], 4
      %s55 = int_to_ptr.vmem [resolvable:$true] %s54
      %s56 = sshll.u32 %s2, 4
      %s57 = int_to_ptr.hbm [resolvable:$true] %s56
      %59 = dma.vmem_to_hbm [thread:$0]  %s55, 128, %s57, [#allocation3]
    $region13: #{tpu_custom_call.1} parent=1 // pred_fallthru
      _
    // Predicated region
    $region14: #{tpu_custom_call.1} parent=1 // pred_check
      _
    $region15: #{tpu_custom_call.1} parent=1 // pred_check_branch
      %61 = sbr.rel (0) target = $region17
    $region16: #{tpu_custom_call.1} parent=1 // pred_region
      %63 = dma.done [#allocation3], 128
    $region17: #{tpu_custom_call.1} parent=1 // pred_fallthru
      _
    %64 = vsyncpa [#allocation3], 1

</llo_original>
